<compile_context>
chip_gen: v6e
topology: v6e:2x2x1
jax: 0.10.0
libtpu: 0.0.40
codegen_flags: <defaults>
</compile_context>

<pallas_src>
import functools

import jax
import jax.numpy as jnp
from jax.experimental import pallas as pl
from jax.experimental.pallas import tpu as pltpu

# ----------------------------- config (small) --------------------------------
BATCH = 2            # "x" in rearrange '(x y) l c'
ENC_IN = 4           # n_vars ("y")
SEQ_LEN = 16         # L (gating input size, expert input length)
D_MODEL = 8          # pred_len P (expert output length)
HIDDEN = 32          # gating hidden size
NUM_EXPERTS = 4      # E
K = 2                # top-k
MOVING_AVG = 5       # series_decomp kernel size (odd)
REVIN_EPS = 1e-5

B_TOTAL = BATCH * ENC_IN          # rows fed to the MoE: (batch * enc_in)
ROW_TILE = 8                      # row tile (B_TOTAL % ROW_TILE == 0; raise to
                                  # 256-1024 once batch*enc_in is realistic,
                                  # re-deriving VMEM budget per chip generation)


# ----------------------------- fused kernel ----------------------------------
def fused_moe_kernel(x_ref, w1_ref, w2_ref, wc_ref, aw_ref, ab_ref,
                     y_ref, imp_ref, load_ref):
    """Fused MixtureOfExperts forward (eval path) for one row tile.

    x  : (TB, L)     raw input rows (gating input)
    w1 : (L, H)      gating Linear1 weight, transposed
    w2 : (H, E)      gating Linear2 weight, transposed
    wc : (L, E*P)    combined expert weights (series_decomp+pad+Linears folded)
    aw : (TB, 1)     RevIN affine weight per row (tiled per-var)
    ab : (TB, 1)     RevIN affine bias per row
    y  : (TB, P)     gate-weighted combined expert output
    imp : (1, E)     per-tile partial importance = sum_rows gates
    load: (1, E)     per-tile partial load       = sum_rows (gates > 0)
    """
    P, E = D_MODEL, NUM_EXPERTS
    x = x_ref[...]                                                  # (TB, L)

    # ---- GatingNetwork MLP + softmax (clean logits; eval path) ----
    h = jnp.maximum(
        jnp.dot(x, w1_ref[...], preferred_element_type=jnp.float32), 0.0)
    logits = jnp.dot(h, w2_ref[...], preferred_element_type=jnp.float32)  # (TB, E)
    m = jnp.max(logits, axis=-1, keepdims=True)
    ex = jnp.exp(logits - m)
    probs = ex * pl.reciprocal(jnp.sum(ex, axis=-1, keepdims=True), approx=True)

    # ---- in-kernel top-k (K max/where passes) + dense gate construction ----
    e_iota = jax.lax.broadcasted_iota(jnp.int32, probs.shape, 1)    # (TB, E)
    remaining = probs
    sels, vals = [], []
    for _ in range(K):                                              # static unroll
        v = jnp.max(remaining, axis=-1, keepdims=True)              # (TB, 1)
        idx = jnp.min(jnp.where(remaining >= v, e_iota, E),
                      axis=-1, keepdims=True)                       # first argmax
        sel = e_iota == idx
        sels.append(sel)
        vals.append(v)
        remaining = jnp.where(sel, -1.0, remaining)                 # probs > 0
    inv_denom = pl.reciprocal(sum(vals) + 1e-6, approx=True)        # (TB, 1)
    gates = jnp.zeros_like(probs)
    sel_count = jnp.zeros_like(probs)
    for sel, v in zip(sels, vals):
        gates = jnp.where(sel, v * inv_denom, gates)
        sel_count = sel_count + sel.astype(jnp.float32)

    # ---- aux-loss partial reductions (per row tile; summed over tiles in XLA) ----
    imp_ref[...] = jnp.sum(gates, axis=0, keepdims=True)            # (1, E)
    load_ref[...] = jnp.sum(sel_count, axis=0, keepdims=True)       # (1, E)

    # ---- RevIN 'norm': per-row (time-axis) standardization + per-var affine ----
    mean = jnp.mean(x, axis=-1, keepdims=True)
    xc = x - mean
    var = jnp.mean(xc * xc, axis=-1, keepdims=True)                 # unbiased=False
    xn = xc * jax.lax.rsqrt(var + REVIN_EPS)
    xn = xn * aw_ref[...] + ab_ref[...]

    # ---- experts: series_decomp + edge-pad + seasonal/trend Linear folded into
    #      wc, so a single MXU dot covers all experts; then sparse combine. ----
    y_all = jnp.dot(xn, wc_ref[...], preferred_element_type=jnp.float32)  # (TB, E*P)
    acc = jnp.zeros((x.shape[0], P), jnp.float32)
    for e in range(E):                                              # static unroll
        acc = acc + gates[:, e:e + 1] * y_all[:, e * P:(e + 1) * P]
    y_ref[...] = acc


# ----------------------------- pallas_call wrapper -----------------------------
def fused_moe_forward(x2d, params):
    B, L = x2d.shape
    H = params["gate_w1_t"].shape[1]
    E = NUM_EXPERTS
    P = D_MODEL
    tb = ROW_TILE
    nt = B // tb
    return pl.pallas_call(
        fused_moe_kernel,
        out_shape=(jax.ShapeDtypeStruct((B, P), jnp.float32),
                   jax.ShapeDtypeStruct((nt, E), jnp.float32),   # importance partials
                   jax.ShapeDtypeStruct((nt, E), jnp.float32)),  # load partials
        grid=(nt,),
        in_specs=[pl.BlockSpec((tb, L), lambda i: (i, 0)),
                  pl.BlockSpec((L, H), lambda i: (0, 0)),
                  pl.BlockSpec((H, E), lambda i: (0, 0)),
                  pl.BlockSpec((L, E * P), lambda i: (0, 0)),
                  pl.BlockSpec((tb, 1), lambda i: (i, 0)),
                  pl.BlockSpec((tb, 1), lambda i: (i, 0))],
        out_specs=(pl.BlockSpec((tb, P), lambda i: (i, 0)),
                   pl.BlockSpec((1, E), lambda i: (i, 0)),
                   pl.BlockSpec((1, E), lambda i: (i, 0))),
        compiler_params=pltpu.CompilerParams(
            dimension_semantics=("parallel",)),
    )(x2d, params["gate_w1_t"], params["gate_w2_t"], params["wc"],
      params["revin_w_rows"], params["revin_b_rows"])


# ----------------------------- JAX glue ---------------------------------------
def cv_squared(v):
    # torch: x.float().var() (unbiased, ddof=1) / (mean**2 + 1e-10)
    if v.shape[0] == 1:
        return jnp.zeros((), jnp.float32)
    v = v.astype(jnp.float32)
    return jnp.var(v, ddof=1) / (jnp.mean(v) ** 2 + 1e-10)


def mixture_of_experts_forward(x, params, loss_coef=1.0):
    """x: (batch*enc_in, seq_len, 1) -> (y: (batch*enc_in, d_model, 1), loss)."""
    x2d = x[..., 0]                                                 # (B, L)

    # One fused kernel: gating + top-k gates + RevIN + experts + combine +
    # per-tile importance/load partials (dense gates never touch HBM).
    y2d, imp_parts, load_parts = fused_moe_forward(x2d, params)

    # Batch-wide aux loss: only two (E,)-sized reductions remain in XLA.
    importance = imp_parts.sum(axis=0)                              # (E,)
    load = load_parts.sum(axis=0)                                   # (E,)
    loss = (cv_squared(importance) + cv_squared(load)) * loss_coef

    return y2d[:, :, None], loss                                    # (B, P, 1)


# ----------------------------- params / offline folding -----------------------
def _decomp_operators(L, ma):
    """Linear operators for series_decomp with edge padding.

    trend = x @ T_op,  seasonal = x @ S_op,  both (L, L), x a length-L row.
    """
    pad = (ma - 1) // 2
    Lp = L + 2 * pad
    # edge-pad operator: x_pad = x @ Pmat, Pmat (L, Lp)
    src = jnp.clip(jnp.arange(Lp) - pad, 0, L - 1)
    Pmat = (jnp.arange(L)[:, None] == src[None, :]).astype(jnp.float32)
    # moving-average (AvgPool1d k=ma, stride=1): trend = x_pad @ A, A (Lp, L)
    r = jnp.arange(Lp)[:, None]
    c = jnp.arange(L)[None, :]
    A = ((r >= c) & (r <= c + ma - 1)).astype(jnp.float32) / float(ma)
    T_op = Pmat @ A
    S_op = jnp.eye(L, dtype=jnp.float32) - T_op
    return S_op, T_op


def init_params(key):
    k1, k2 = jax.random.split(key)
    # GatingNetwork: Linear(L, H, bias=False), Linear(H, E, bias=False)
    w1 = jax.random.normal(k1, (HIDDEN, SEQ_LEN), jnp.float32) / jnp.sqrt(SEQ_LEN)
    w2 = jax.random.normal(k2, (NUM_EXPERTS, HIDDEN), jnp.float32) / jnp.sqrt(HIDDEN)
    # SharedExtractor: seasonal / trend Linear(L, P, bias=False), constant 1/L init.
    ws = jnp.full((NUM_EXPERTS, D_MODEL, SEQ_LEN), 1.0 / SEQ_LEN, jnp.float32)
    wt = jnp.full((NUM_EXPERTS, D_MODEL, SEQ_LEN), 1.0 / SEQ_LEN, jnp.float32)
    # Fold series_decomp + edge-pad into the expert weights:
    #   expert_e(x) = seasonal @ Ws_e^T + trend @ Wt_e^T
    #               = x @ (S_op @ Ws_e^T + T_op @ Wt_e^T) = x @ Wc_e
    S_op, T_op = _decomp_operators(SEQ_LEN, MOVING_AVG)
    wc = jnp.concatenate(
        [S_op @ ws[e].T + T_op @ wt[e].T for e in range(NUM_EXPERTS)],
        axis=1)                                              # (L, E*P)
    # RevIN affine, pre-tiled to per-row (B, 1) vectors (row b -> var b % ENC_IN).
    revin_w = jnp.ones((ENC_IN,), jnp.float32)
    revin_b = jnp.zeros((ENC_IN,), jnp.float32)
    return dict(
        gate_w1_t=w1.T,                              # (L, H)
        gate_w2_t=w2.T,                              # (H, E)
        wc=wc,                                       # (L, E*P)
        revin_w_rows=jnp.tile(revin_w, BATCH)[:, None],   # (B, 1)
        revin_b_rows=jnp.tile(revin_b, BATCH)[:, None],   # (B, 1)
    )


if __name__ == "__main__":
    key = jax.random.PRNGKey(0)
    pkey, xkey = jax.random.split(key)
    params = init_params(pkey)
    x = jax.random.normal(xkey, (B_TOTAL, SEQ_LEN, 1), jnp.float32)

    fwd = jax.jit(functools.partial(mixture_of_experts_forward, loss_coef=1.0))
    y, loss = fwd(x, params)
    jax.block_until_ready((y, loss))

    assert y.shape == (B_TOTAL, D_MODEL, 1) and y.dtype == jnp.float32
    assert loss.shape == ()
    assert bool(jnp.all(jnp.isfinite(y))) and bool(jnp.isfinite(loss))
    print("KERNEL_OK")
</pallas_src>

<mosaic_0001>
module attributes {stable_mosaic.version = 11 : i64} {
  func.func @fused_moe_kernel(%arg0: i32, %arg1: memref<8x16xf32, #tpu.memory_space<vmem>>, %arg2: memref<16x32xf32, #tpu.memory_space<vmem>>, %arg3: memref<32x4xf32, #tpu.memory_space<vmem>>, %arg4: memref<16x32xf32, #tpu.memory_space<vmem>>, %arg5: memref<8x1xf32, #tpu.memory_space<vmem>>, %arg6: memref<8x1xf32, #tpu.memory_space<vmem>>, %arg7: memref<8x8xf32, #tpu.memory_space<vmem>>, %arg8: memref<1x4xf32, #tpu.memory_space<vmem>>, %arg9: memref<1x4xf32, #tpu.memory_space<vmem>>) attributes {dimension_semantics = [#tpu.dimension_semantics<parallel>], iteration_bounds = array<i64: 1>, scalar_prefetch = 0 : i64, scratch_operands = 0 : i64, tpu.core_type = #tpu.core_type<tc>, window_params = [{transform_indices = @transform_0, window_bounds = array<i64: 8, 16>}, {pipeline_mode = #tpu.pipeline_mode<synchronous>, transform_indices = @transform_1, window_bounds = array<i64: 16, 32>}, {pipeline_mode = #tpu.pipeline_mode<synchronous>, transform_indices = @transform_2, window_bounds = array<i64: 32, 4>}, {pipeline_mode = #tpu.pipeline_mode<synchronous>, transform_indices = @transform_3, window_bounds = array<i64: 16, 32>}, {transform_indices = @transform_4, window_bounds = array<i64: 8, 1>}, {transform_indices = @transform_5, window_bounds = array<i64: 8, 1>}, {transform_indices = @transform_6, window_bounds = array<i64: 8, 8>}, {transform_indices = @transform_7, window_bounds = array<i64: 1, 4>}, {transform_indices = @transform_8, window_bounds = array<i64: 1, 4>}]} {
    %c0 = arith.constant 0 : index
    %c0_0 = arith.constant 0 : index
    %0 = vector.load %arg1[%c0, %c0_0] : memref<8x16xf32, #tpu.memory_space<vmem>>, vector<8x16xf32>
    %c0_1 = arith.constant 0 : index
    %c0_2 = arith.constant 0 : index
    %1 = vector.load %arg2[%c0_1, %c0_2] : memref<16x32xf32, #tpu.memory_space<vmem>>, vector<16x32xf32>
    %cst = arith.constant dense<0.000000e+00> : vector<8x32xf32>
    %2 = tpu.matmul %0, %1, %cst {dimension_numbers = #tpu.dot_dimension_numbers<[1], [0], [0], [1], [0, 0, 1, 1], [], []>} : vector<8x16xf32>, vector<16x32xf32>, vector<8x32xf32> -> vector<8x32xf32>
    %cst_3 = arith.constant 0.000000e+00 : f32
    %3 = vector.broadcast %cst_3 : f32 to vector<8x32xf32>
    %4 = arith.maximumf %2, %3 : vector<8x32xf32>
    %c0_4 = arith.constant 0 : index
    %c0_5 = arith.constant 0 : index
    %5 = vector.load %arg3[%c0_4, %c0_5] : memref<32x4xf32, #tpu.memory_space<vmem>>, vector<32x4xf32>
    %cst_6 = arith.constant dense<0.000000e+00> : vector<8x4xf32>
    %6 = tpu.matmul %4, %5, %cst_6 {dimension_numbers = #tpu.dot_dimension_numbers<[1], [0], [0], [1], [0, 0, 1, 1], [], []>} : vector<8x32xf32>, vector<32x4xf32>, vector<8x4xf32> -> vector<8x4xf32>
    %cst_7 = arith.constant dense<0xFF800000> : vector<8xf32>
    %7 = vector.multi_reduction <maximumf>, %6, %cst_7 [1] : vector<8x4xf32> to vector<8xf32>
    %8 = vector.shape_cast %7 : vector<8xf32> to vector<8x1xf32>
    %9 = vector.broadcast %8 : vector<8x1xf32> to vector<8x4xf32>
    %10 = arith.subf %6, %9 : vector<8x4xf32>
    %11 = math.exp %10 : vector<8x4xf32>
    %cst_8 = arith.constant dense<0.000000e+00> : vector<8xf32>
    %12 = vector.multi_reduction <add>, %11, %cst_8 [1] : vector<8x4xf32> to vector<8xf32>
    %13 = vector.shape_cast %12 : vector<8xf32> to vector<8x1xf32>
    %14 = tpu.reciprocal %13 {approx = true} : vector<8x1xf32> -> vector<8x1xf32>
    %15 = vector.broadcast %14 : vector<8x1xf32> to vector<8x4xf32>
    %16 = arith.mulf %11, %15 : vector<8x4xf32>
    %17 = tpu.iota {dimensions = array<i32: 1>} : vector<8x4xi32>
    %cst_9 = arith.constant dense<0xFF800000> : vector<8xf32>
    %18 = vector.multi_reduction <maximumf>, %16, %cst_9 [1] : vector<8x4xf32> to vector<8xf32>
    %19 = vector.shape_cast %18 : vector<8xf32> to vector<8x1xf32>
    %20 = vector.broadcast %19 : vector<8x1xf32> to vector<8x4xf32>
    %21 = arith.cmpf oge, %16, %20 : vector<8x4xf32>
    %c4_i32 = arith.constant 4 : i32
    %22 = vector.broadcast %c4_i32 : i32 to vector<8x4xi32>
    %23 = arith.select %21, %17, %22 : vector<8x4xi1>, vector<8x4xi32>
    %cst_10 = arith.constant dense<2147483647> : vector<8xi32>
    %24 = vector.multi_reduction <minsi>, %23, %cst_10 [1] : vector<8x4xi32> to vector<8xi32>
    %25 = vector.shape_cast %24 : vector<8xi32> to vector<8x1xi32>
    %26 = vector.broadcast %25 : vector<8x1xi32> to vector<8x4xi32>
    %27 = arith.cmpi eq, %17, %26 : vector<8x4xi32>
    %cst_11 = arith.constant -1.000000e+00 : f32
    %28 = vector.broadcast %cst_11 : f32 to vector<8x4xf32>
    %29 = arith.select %27, %28, %16 : vector<8x4xi1>, vector<8x4xf32>
    %cst_12 = arith.constant dense<0xFF800000> : vector<8xf32>
    %30 = vector.multi_reduction <maximumf>, %29, %cst_12 [1] : vector<8x4xf32> to vector<8xf32>
    %31 = vector.shape_cast %30 : vector<8xf32> to vector<8x1xf32>
    %32 = vector.broadcast %31 : vector<8x1xf32> to vector<8x4xf32>
    %33 = arith.cmpf oge, %29, %32 : vector<8x4xf32>
    %c4_i32_13 = arith.constant 4 : i32
    %34 = vector.broadcast %c4_i32_13 : i32 to vector<8x4xi32>
    %35 = arith.select %33, %17, %34 : vector<8x4xi1>, vector<8x4xi32>
    %cst_14 = arith.constant dense<2147483647> : vector<8xi32>
    %36 = vector.multi_reduction <minsi>, %35, %cst_14 [1] : vector<8x4xi32> to vector<8xi32>
    %37 = vector.shape_cast %36 : vector<8xi32> to vector<8x1xi32>
    %38 = vector.broadcast %37 : vector<8x1xi32> to vector<8x4xi32>
    %39 = arith.cmpi eq, %17, %38 : vector<8x4xi32>
    %cst_15 = arith.constant 0.000000e+00 : f32
    %40 = vector.broadcast %cst_15 : f32 to vector<8x1xf32>
    %41 = arith.addf %40, %19 : vector<8x1xf32>
    %42 = arith.addf %41, %31 : vector<8x1xf32>
    %cst_16 = arith.constant 9.99999997E-7 : f32
    %43 = vector.broadcast %cst_16 : f32 to vector<8x1xf32>
    %44 = arith.addf %42, %43 : vector<8x1xf32>
    %45 = tpu.reciprocal %44 {approx = true} : vector<8x1xf32> -> vector<8x1xf32>
    %cst_17 = arith.constant 0.000000e+00 : f32
    %46 = vector.broadcast %cst_17 : f32 to vector<8x4xf32>
    %cst_18 = arith.constant 0.000000e+00 : f32
    %47 = vector.broadcast %cst_18 : f32 to vector<8x4xf32>
    %48 = arith.mulf %19, %45 : vector<8x1xf32>
    %49 = vector.shape_cast %48 : vector<8x1xf32> to vector<8x1xf32>
    %50 = vector.broadcast %49 : vector<8x1xf32> to vector<8x4xf32>
    %51 = arith.select %27, %50, %46 : vector<8x4xi1>, vector<8x4xf32>
    %52 = arith.extui %27 : vector<8x4xi1> to vector<8x4xi32>
    %53 = arith.sitofp %52 : vector<8x4xi32> to vector<8x4xf32>
    %54 = arith.addf %47, %53 : vector<8x4xf32>
    %55 = arith.mulf %31, %45 : vector<8x1xf32>
    %56 = vector.shape_cast %55 : vector<8x1xf32> to vector<8x1xf32>
    %57 = vector.broadcast %56 : vector<8x1xf32> to vector<8x4xf32>
    %58 = arith.select %39, %57, %51 : vector<8x4xi1>, vector<8x4xf32>
    %59 = arith.extui %39 : vector<8x4xi1> to vector<8x4xi32>
    %60 = arith.sitofp %59 : vector<8x4xi32> to vector<8x4xf32>
    %61 = arith.addf %54, %60 : vector<8x4xf32>
    %cst_19 = arith.constant dense<0.000000e+00> : vector<4xf32>
    %62 = vector.multi_reduction <add>, %58, %cst_19 [0] : vector<8x4xf32> to vector<4xf32>
    %63 = vector.shape_cast %62 : vector<4xf32> to vector<1x4xf32>
    %c0_20 = arith.constant 0 : index
    %c0_21 = arith.constant 0 : index
    %64 = vector.load %arg8[%c0_20, %c0_21] : memref<1x4xf32, #tpu.memory_space<vmem>>, vector<1x4xf32>
    tpu.vector_store %arg8[%c0_20, %c0_21], %63 {strides = array<i32>} : memref<1x4xf32, #tpu.memory_space<vmem>>, vector<1x4xf32>,
    %cst_22 = arith.constant dense<0.000000e+00> : vector<4xf32>
    %65 = vector.multi_reduction <add>, %61, %cst_22 [0] : vector<8x4xf32> to vector<4xf32>
    %66 = vector.shape_cast %65 : vector<4xf32> to vector<1x4xf32>
    %c0_23 = arith.constant 0 : index
    %c0_24 = arith.constant 0 : index
    %67 = vector.load %arg9[%c0_23, %c0_24] : memref<1x4xf32, #tpu.memory_space<vmem>>, vector<1x4xf32>
    tpu.vector_store %arg9[%c0_23, %c0_24], %66 {strides = array<i32>} : memref<1x4xf32, #tpu.memory_space<vmem>>, vector<1x4xf32>,
    %cst_25 = arith.constant dense<0.000000e+00> : vector<8xf32>
    %68 = vector.multi_reduction <add>, %0, %cst_25 [1] : vector<8x16xf32> to vector<8xf32>
    %69 = vector.shape_cast %68 : vector<8xf32> to vector<8x1xf32>
    %cst_26 = arith.constant 1.600000e+01 : f32
    %70 = vector.broadcast %cst_26 : f32 to vector<8x1xf32>
    %71 = arith.divf %69, %70 : vector<8x1xf32>
    %72 = vector.broadcast %71 : vector<8x1xf32> to vector<8x16xf32>
    %73 = arith.subf %0, %72 : vector<8x16xf32>
    %74 = arith.mulf %73, %73 : vector<8x16xf32>
    %cst_27 = arith.constant dense<0.000000e+00> : vector<8xf32>
    %75 = vector.multi_reduction <add>, %74, %cst_27 [1] : vector<8x16xf32> to vector<8xf32>
    %76 = vector.shape_cast %75 : vector<8xf32> to vector<8x1xf32>
    %cst_28 = arith.constant 1.600000e+01 : f32
    %77 = vector.broadcast %cst_28 : f32 to vector<8x1xf32>
    %78 = arith.divf %76, %77 : vector<8x1xf32>
    %cst_29 = arith.constant 9.99999974E-6 : f32
    %79 = vector.broadcast %cst_29 : f32 to vector<8x1xf32>
    %80 = arith.addf %78, %79 : vector<8x1xf32>
    %81 = math.rsqrt %80 : vector<8x1xf32>
    %82 = vector.broadcast %81 : vector<8x1xf32> to vector<8x16xf32>
    %83 = arith.mulf %73, %82 : vector<8x16xf32>
    %c0_30 = arith.constant 0 : index
    %c0_31 = arith.constant 0 : index
    %84 = vector.load %arg5[%c0_30, %c0_31] : memref<8x1xf32, #tpu.memory_space<vmem>>, vector<8x1xf32>
    %85 = vector.broadcast %84 : vector<8x1xf32> to vector<8x16xf32>
    %86 = arith.mulf %83, %85 : vector<8x16xf32>
    %c0_32 = arith.constant 0 : index
    %c0_33 = arith.constant 0 : index
    %87 = vector.load %arg6[%c0_32, %c0_33] : memref<8x1xf32, #tpu.memory_space<vmem>>, vector<8x1xf32>
    %88 = vector.broadcast %87 : vector<8x1xf32> to vector<8x16xf32>
    %89 = arith.addf %86, %88 : vector<8x16xf32>
    %c0_34 = arith.constant 0 : index
    %c0_35 = arith.constant 0 : index
    %90 = vector.load %arg4[%c0_34, %c0_35] : memref<16x32xf32, #tpu.memory_space<vmem>>, vector<16x32xf32>
    %cst_36 = arith.constant dense<0.000000e+00> : vector<8x32xf32>
    %91 = tpu.matmul %89, %90, %cst_36 {dimension_numbers = #tpu.dot_dimension_numbers<[1], [0], [0], [1], [0, 0, 1, 1], [], []>} : vector<8x16xf32>, vector<16x32xf32>, vector<8x32xf32> -> vector<8x32xf32>
    %cst_37 = arith.constant 0.000000e+00 : f32
    %92 = vector.broadcast %cst_37 : f32 to vector<8x8xf32>
    %93 = vector.extract_strided_slice %58 {offsets = [0, 0], sizes = [8, 1], strides = [1, 1]} : vector<8x4xf32> to vector<8x1xf32>
    %94 = vector.extract_strided_slice %91 {offsets = [0, 0], sizes = [8, 8], strides = [1, 1]} : vector<8x32xf32> to vector<8x8xf32>
    %95 = vector.broadcast %93 : vector<8x1xf32> to vector<8x8xf32>
    %96 = arith.mulf %95, %94 : vector<8x8xf32>
    %97 = arith.addf %92, %96 : vector<8x8xf32>
    %98 = vector.extract_strided_slice %58 {offsets = [0, 1], sizes = [8, 1], strides = [1, 1]} : vector<8x4xf32> to vector<8x1xf32>
    %99 = vector.extract_strided_slice %91 {offsets = [0, 8], sizes = [8, 8], strides = [1, 1]} : vector<8x32xf32> to vector<8x8xf32>
    %100 = vector.broadcast %98 : vector<8x1xf32> to vector<8x8xf32>
    %101 = arith.mulf %100, %99 : vector<8x8xf32>
    %102 = arith.addf %97, %101 : vector<8x8xf32>
    %103 = vector.extract_strided_slice %58 {offsets = [0, 2], sizes = [8, 1], strides = [1, 1]} : vector<8x4xf32> to vector<8x1xf32>
    %104 = vector.extract_strided_slice %91 {offsets = [0, 16], sizes = [8, 8], strides = [1, 1]} : vector<8x32xf32> to vector<8x8xf32>
    %105 = vector.broadcast %103 : vector<8x1xf32> to vector<8x8xf32>
    %106 = arith.mulf %105, %104 : vector<8x8xf32>
    %107 = arith.addf %102, %106 : vector<8x8xf32>
    %108 = vector.extract_strided_slice %58 {offsets = [0, 3], sizes = [8, 1], strides = [1, 1]} : vector<8x4xf32> to vector<8x1xf32>
    %109 = vector.extract_strided_slice %91 {offsets = [0, 24], sizes = [8, 8], strides = [1, 1]} : vector<8x32xf32> to vector<8x8xf32>
    %110 = vector.broadcast %108 : vector<8x1xf32> to vector<8x8xf32>
    %111 = arith.mulf %110, %109 : vector<8x8xf32>
    %112 = arith.addf %107, %111 : vector<8x8xf32>
    %c0_38 = arith.constant 0 : index
    %c0_39 = arith.constant 0 : index
    %113 = vector.load %arg7[%c0_38, %c0_39] : memref<8x8xf32, #tpu.memory_space<vmem>>, vector<8x8xf32>
    tpu.vector_store %arg7[%c0_38, %c0_39], %112 {strides = array<i32>} : memref<8x8xf32, #tpu.memory_space<vmem>>, vector<8x8xf32>,
    return
  }
  func.func @transform_0(%arg0: i32) -> (i32, i32) {
    %c0_i32 = arith.constant 0 : i32
    %c0_i32_0 = arith.constant 0 : i32
    return %arg0, %c0_i32 : i32, i32
  }
  func.func @transform_1(%arg0: i32) -> (i32, i32) {
    %c0_i32 = arith.constant 0 : i32
    %c0_i32_0 = arith.constant 0 : i32
    %c0_i32_1 = arith.constant 0 : i32
    return %c0_i32, %c0_i32_0 : i32, i32
  }
  func.func @transform_2(%arg0: i32) -> (i32, i32) {
    %c0_i32 = arith.constant 0 : i32
    %c0_i32_0 = arith.constant 0 : i32
    %c0_i32_1 = arith.constant 0 : i32
    return %c0_i32, %c0_i32_0 : i32, i32
  }
  func.func @transform_3(%arg0: i32) -> (i32, i32) {
    %c0_i32 = arith.constant 0 : i32
    %c0_i32_0 = arith.constant 0 : i32
    %c0_i32_1 = arith.constant 0 : i32
    return %c0_i32, %c0_i32_0 : i32, i32
  }
  func.func @transform_4(%arg0: i32) -> (i32, i32) {
    %c0_i32 = arith.constant 0 : i32
    %c0_i32_0 = arith.constant 0 : i32
    return %arg0, %c0_i32 : i32, i32
  }
  func.func @transform_5(%arg0: i32) -> (i32, i32) {
    %c0_i32 = arith.constant 0 : i32
    %c0_i32_0 = arith.constant 0 : i32
    return %arg0, %c0_i32 : i32, i32
  }
  func.func @transform_6(%arg0: i32) -> (i32, i32) {
    %c0_i32 = arith.constant 0 : i32
    %c0_i32_0 = arith.constant 0 : i32
    return %arg0, %c0_i32 : i32, i32
  }
  func.func @transform_7(%arg0: i32) -> (i32, i32) {
    %c0_i32 = arith.constant 0 : i32
    %c0_i32_0 = arith.constant 0 : i32
    return %arg0, %c0_i32 : i32, i32
  }
  func.func @transform_8(%arg0: i32) -> (i32, i32) {
    %c0_i32 = arith.constant 0 : i32
    %c0_i32_0 = arith.constant 0 : i32
    return %arg0, %c0_i32 : i32, i32
  }
}

</mosaic_0001>

<llo_original>
// kernel: mixture_of_experts_forward.1
$region0: #{mixture_of_experts_forward.1}
  #allocation0 [shape = 'u32[]', space=smem, size = 0x4, offset = 0x4, fixed_abs, tag = 'smem constant byte address 0x4 - core index']
  #allocation1 [shape = 'u32[144,128]{1,0:T(1,128)}', space=vmem, size = 0x12000, scoped, tag = 'internal scratch']
  %s0 = inlined_call_operand.vmem [shape: f32[8,16], index: 0, kind: input, shape index: {}]
  %s1 = inlined_call_operand.vmem [shape: f32[16,32], index: 1, kind: input, shape index: {}]
  %s2 = inlined_call_operand.vmem [shape: f32[32,4], index: 2, kind: input, shape index: {}]
  %s3 = inlined_call_operand.vmem [shape: f32[16,32], index: 3, kind: input, shape index: {}]
  %s4 = inlined_call_operand.vmem [shape: f32[8,1], index: 4, kind: input, shape index: {}]
  %s5 = inlined_call_operand.vmem [shape: f32[8,1], index: 5, kind: input, shape index: {}]
  %s6 = inlined_call_operand.hbm [shape: f32[8,8], index: 6, kind: output, shape index: {0}]
  %s7 = inlined_call_operand.vmem [shape: f32[1,4], index: 7, kind: output, shape index: {1}]
  %s8 = inlined_call_operand.vmem [shape: f32[1,4], index: 8, kind: output, shape index: {2}]
  %9 = xla_tuple %s6, %s7, %s8
  %s10 = sld [smem:[#allocation0]]
  $region50: #{mixture_of_experts_forward.1} parent=0
    _
  %s12 = ssub.s32 1, %s10
  %s13 = scalar_select 0, %s12, %s10
  $region1: #{mixture_of_experts_forward.1} parent=0
    #allocation2 [shape = 'u8[4096]{0}', space=vmem, size = 0x1000, scoped, tag = 'output window, operand 0, single buffered']
    #allocation3 [shape = 's32[1]{0}', space=sflag, size = 0x4, scoped, tag = 'scoped memory for mixture_of_experts_forward.1']
    %14 = vsyncpa [#allocation3], 0
    // Predicated region
    $region2: #{mixture_of_experts_forward.1} parent=1 // pred_check
      _
    $region3: #{mixture_of_experts_forward.1} parent=1 // pred_check_branch
      %16 = sbr.rel (0) target = $region5
    $region4: #{mixture_of_experts_forward.1} parent=1 // pred_region
      _
    $region5: #{mixture_of_experts_forward.1} parent=1 // pred_fallthru
      _
    // Predicated region
    $region6: #{mixture_of_experts_forward.1} parent=1 // pred_check
      _
    $region7: #{mixture_of_experts_forward.1} parent=1 // pred_check_branch
      %18 = sbr.rel (0) target = $region9
    $region8: #{mixture_of_experts_forward.1} parent=1 // pred_region
      _
    $region9: #{mixture_of_experts_forward.1} parent=1 // pred_fallthru
      _
    // Predicated region
    $region10: #{mixture_of_experts_forward.1} parent=1 // pred_check
      _
    $region11: #{mixture_of_experts_forward.1} parent=1 // pred_check_branch
      %20 = sbr.rel (0) target = $region13
    $region12: #{mixture_of_experts_forward.1} parent=1 // pred_region
      _
    $region13: #{mixture_of_experts_forward.1} parent=1 // pred_fallthru
      _
    // Predicated region
    $region14: #{mixture_of_experts_forward.1} parent=1 // pred_check
      _
    $region15: #{mixture_of_experts_forward.1} parent=1 // pred_check_branch
      %22 = sbr.rel (0) target = $region17
    $region16: #{mixture_of_experts_forward.1} parent=1 // pred_region
      _
    $region17: #{mixture_of_experts_forward.1} parent=1 // pred_fallthru
      _
    // Predicated region
    $region18: #{mixture_of_experts_forward.1} parent=1 // pred_check
      _
    $region19: #{mixture_of_experts_forward.1} parent=1 // pred_check_branch
      %24 = sbr.rel (0) target = $region21
    $region20: #{mixture_of_experts_forward.1} parent=1 // pred_region
      _
    $region21: #{mixture_of_experts_forward.1} parent=1 // pred_fallthru
      _
    // Predicated region
    $region22: #{mixture_of_experts_forward.1} parent=1 // pred_check
      _
    $region23: #{mixture_of_experts_forward.1} parent=1 // pred_check_branch
      %26 = sbr.rel (0) target = $region25
    $region24: #{mixture_of_experts_forward.1} parent=1 // pred_region
      _
    $region25: #{mixture_of_experts_forward.1} parent=1 // pred_fallthru
      _
    %v27 = vld [vmem:[%s0] sm:$0xff]
    %v28 = vld [vmem:[%s1] sm:$0xff]
    %v29 = vld [vmem:[%s1 + $0x8] sm:$0xff]
    %vm30 = vcmask 130048
    %v32 = vsel %vm30, %v27, 0
    %34 = vmatprep.subr.mxu0 0.0
    %35 = vmatpush1.msra.mxu0 0.0
    %36 = vmatprep.subr.mxu0 0.0
    %37 = vmatpush1.msra.mxu0 0.0
    %38 = vmatprep.subr.mxu0 0.0
    %39 = vmatpush1.msra.mxu0 0.0
    %40 = vmatprep.subr.mxu0 0.0
    %41 = vmatpush1.msra.mxu0 0.0
    %42 = vmatprep.subr.mxu0 0.0
    %43 = vmatpush1.msra.mxu0 0.0
    %44 = vmatprep.subr.mxu0 0.0
    %45 = vmatpush1.msra.mxu0 0.0
    %46 = vmatprep.subr.mxu0 0.0
    %47 = vmatpush1.msra.mxu0 0.0
    %48 = vmatprep.subr.mxu0 0.0
    %49 = vmatpush1.msra.mxu0 0.0
    %50 = vmatprep.subr.mxu0 0.0
    %51 = vmatpush1.msra.mxu0 0.0
    %52 = vmatprep.subr.mxu0 0.0
    %53 = vmatpush1.msra.mxu0 0.0
    %54 = vmatprep.subr.mxu0 0.0
    %55 = vmatpush1.msra.mxu0 0.0
    %56 = vmatprep.subr.mxu0 0.0
    %57 = vmatpush1.msra.mxu0 0.0
    %58 = vmatprep.subr.mxu0 0.0
    %59 = vmatpush1.msra.mxu0 0.0
    %60 = vmatprep.subr.mxu0 0.0
    %61 = vmatpush1.msra.mxu0 0.0
    %62 = vmatprep.subr.mxu0 0.0
    %63 = vmatpush1.msra.mxu0 %v29
    %64 = vmatprep.subr.mxu0 0.0
    %65 = vmatpush1.msra.mxu0 %v28
    %66 = vmatprep.subr.mxu0 0.0
    %67 = vmatpush2.msra.mxu0 0.0
    %68 = vmatprep.subr.mxu0 0.0
    %69 = vmatpush2.msra.mxu0 0.0
    %70 = vmatprep.subr.mxu0 0.0
    %71 = vmatpush2.msra.mxu0 0.0
    %72 = vmatprep.subr.mxu0 0.0
    %73 = vmatpush2.msra.mxu0 0.0
    %74 = vmatprep.subr.mxu0 0.0
    %75 = vmatpush2.msra.mxu0 0.0
    %76 = vmatprep.subr.mxu0 0.0
    %77 = vmatpush2.msra.mxu0 0.0
    %78 = vmatprep.subr.mxu0 0.0
    %79 = vmatpush2.msra.mxu0 0.0
    %80 = vmatprep.subr.mxu0 0.0
    %81 = vmatpush2.msra.mxu0 0.0
    %82 = vmatprep.subr.mxu0 0.0
    %83 = vmatpush2.msra.mxu0 0.0
    %84 = vmatprep.subr.mxu0 0.0
    %85 = vmatpush2.msra.mxu0 0.0
    %86 = vmatprep.subr.mxu0 0.0
    %87 = vmatpush2.msra.mxu0 0.0
    %88 = vmatprep.subr.mxu0 0.0
    %89 = vmatpush2.msra.mxu0 0.0
    %90 = vmatprep.subr.mxu0 0.0
    %91 = vmatpush2.msra.mxu0 0.0
    %92 = vmatprep.subr.mxu0 0.0
    %93 = vmatpush2.msra.mxu0 0.0
    %94 = vmatprep.subr.mxu0 0.0
    %95 = vmatpush2.msra.mxu0 0.0
    %96 = vmatprep.subr.mxu0 0.0
    %97 = vmatpush2.msra.mxu0 0.0
    %98 = vmatprep.mubr.f32.mxu0 0.0
    %99 = vmatmul.mubr.f32.gmra.mxu0 %v32
    %v100 = vpop.f32.mrf.mxu0
    %v101 = vadd.f32 0.0, %v100
    %v102 = vpop.f32.mrf.mxu0
    %103 = vdwg.mxu0
    %v104 = vmax.f32 %v101, 0.0
    %v105 = vld [vmem:[%s2] sm:$0xff]
    %v106 = vld [vmem:[%s2 + $0x8] sm:$0xff]
    %v107 = vld [vmem:[%s2 + $0x10] sm:$0xff]
    %v108 = vld [vmem:[%s2 + $0x18] sm:$0xff]
    %vm109 = vcmask 261120
    %v111 = vsel %vm109, %v104, 0
    %113 = vmatprep.subr.mxu0 0.0
    %114 = vmatpush1.msra.mxu0 0.0
    %115 = vmatprep.subr.mxu0 0.0
    %116 = vmatpush1.msra.mxu0 0.0
    %117 = vmatprep.subr.mxu0 0.0
    %118 = vmatpush1.msra.mxu0 0.0
    %119 = vmatprep.subr.mxu0 0.0
    %120 = vmatpush1.msra.mxu0 0.0
    %121 = vmatprep.subr.mxu0 0.0
    %122 = vmatpush1.msra.mxu0 0.0
    %123 = vmatprep.subr.mxu0 0.0
    %124 = vmatpush1.msra.mxu0 0.0
    %125 = vmatprep.subr.mxu0 0.0
    %126 = vmatpush1.msra.mxu0 0.0
    %127 = vmatprep.subr.mxu0 0.0
    %128 = vmatpush1.msra.mxu0 0.0
    %129 = vmatprep.subr.mxu0 0.0
    %130 = vmatpush1.msra.mxu0 0.0
    %131 = vmatprep.subr.mxu0 0.0
    %132 = vmatpush1.msra.mxu0 0.0
    %133 = vmatprep.subr.mxu0 0.0
    %134 = vmatpush1.msra.mxu0 0.0
    %135 = vmatprep.subr.mxu0 0.0
    %136 = vmatpush1.msra.mxu0 0.0
    %137 = vmatprep.subr.mxu0 0.0
    %138 = vmatpush1.msra.mxu0 %v108
    %139 = vmatprep.subr.mxu0 0.0
    %140 = vmatpush1.msra.mxu0 %v107
    %141 = vmatprep.subr.mxu0 0.0
    %142 = vmatpush1.msra.mxu0 %v106
    %143 = vmatprep.subr.mxu0 0.0
    %144 = vmatpush1.msra.mxu0 %v105
    %145 = vmatprep.subr.mxu0 0.0
    %146 = vmatpush2.msra.mxu0 0.0
    %147 = vmatprep.subr.mxu0 0.0
    %148 = vmatpush2.msra.mxu0 0.0
    %149 = vmatprep.subr.mxu0 0.0
    %150 = vmatpush2.msra.mxu0 0.0
    %151 = vmatprep.subr.mxu0 0.0
    %152 = vmatpush2.msra.mxu0 0.0
    %153 = vmatprep.subr.mxu0 0.0
    %154 = vmatpush2.msra.mxu0 0.0
    %155 = vmatprep.subr.mxu0 0.0
    %156 = vmatpush2.msra.mxu0 0.0
    %157 = vmatprep.subr.mxu0 0.0
    %158 = vmatpush2.msra.mxu0 0.0
    %159 = vmatprep.subr.mxu0 0.0
    %160 = vmatpush2.msra.mxu0 0.0
    %161 = vmatprep.subr.mxu0 0.0
    %162 = vmatpush2.msra.mxu0 0.0
    %163 = vmatprep.subr.mxu0 0.0
    %164 = vmatpush2.msra.mxu0 0.0
    %165 = vmatprep.subr.mxu0 0.0
    %166 = vmatpush2.msra.mxu0 0.0
    %167 = vmatprep.subr.mxu0 0.0
    %168 = vmatpush2.msra.mxu0 0.0
    %169 = vmatprep.subr.mxu0 0.0
    %170 = vmatpush2.msra.mxu0 0.0
    %171 = vmatprep.subr.mxu0 0.0
    %172 = vmatpush2.msra.mxu0 0.0
    %173 = vmatprep.subr.mxu0 0.0
    %174 = vmatpush2.msra.mxu0 0.0
    %175 = vmatprep.subr.mxu0 0.0
    %176 = vmatpush2.msra.mxu0 0.0
    %177 = vmatprep.mubr.f32.mxu0 0.0
    %178 = vmatmul.mubr.f32.gmra.mxu0 %v111
    %v179 = vpop.f32.mrf.mxu0
    %v180 = vadd.f32 0.0, %v179
    %v181 = vpop.f32.mrf.mxu0
    %182 = vdwg.mxu0
    %vm183 = vcmask 31744
    %v184 = vsel %vm183, %v180, -inf
    %185 = vmax.xlane.f32.xlu0 %v184
    %v186 = vpop.xlane.xlu0 %185
    %v187 = vsub.f32 %v180, %v186
    %v188 = vmul.f32 %v187, 1.442695
    %v189 = vpow.pop %v188
    %v190 = vsel %vm183, %v189, 0.0
    %191 = vadd.xlane.f32.xlu0 %v190
    %v192 = vpop.xlane.xlu0 %191
    %v193 = vrcp.pop %v192
    %v194 = vmul.f32 %v189, %v193
    %v195 = vlaneseq
    %v196 = vand.u32 %v195, 127
    %v197 = vsel %vm183, %v194, -inf
    %198 = vmax.xlane.f32.xlu0 %v197
    %v199 = vpop.xlane.xlu0 %198
    %vm200 = vcmp.ge.f32.partialorder %v194, %v199
    %v201 = vsel %vm200, %v196, 4
    %v202 = vsel %vm183, %v201, 2147483647
    %v203 = vand.u32 %v202, 65535
    %v204 = vshra.s32 %v202, 16
    %v205 = vcvt.s32.f32 %v203
    %v206 = vcvt.s32.f32 %v204
    %207 = vmin.xlane.f32.xlu0 %v206
    %v208 = vpop.xlane.xlu0 %207
    %vm209 = vcmp.eq.f32.partialorder %v206, %v208
    %v210 = vsel %vm209, %v205, inf
    %211 = vmin.xlane.f32.xlu0 %v210
    %v212 = vpop.xlane.xlu0 %211
    %v213 = vcvt.f32.s32 %v212
    %v214 = vcvt.f32.s32 %v208
    %v215 = vshll.u32 %v214, 16
    %v216 = vadd.s32 %v215, %v213
    %vm217 = vcmp.eq.s32.totalorder %v196, %v216
    %v218 = vsel %vm217, -1.0, %v194
    %v219 = vsel %vm183, %v218, -inf
    %220 = vmax.xlane.f32.xlu0 %v219
    %v221 = vpop.xlane.xlu0 %220
    %vm222 = vcmp.ge.f32.partialorder %v218, %v221
    %v223 = vsel %vm222, %v196, 4
    %v224 = vsel %vm183, %v223, 2147483647
    %v225 = vand.u32 %v224, 65535
    %v226 = vshra.s32 %v224, 16
    %v227 = vcvt.s32.f32 %v225
    %v228 = vcvt.s32.f32 %v226
    %229 = vmin.xlane.f32.xlu0 %v228
    %v230 = vpop.xlane.xlu0 %229
    %vm231 = vcmp.eq.f32.partialorder %v228, %v230
    %v232 = vsel %vm231, %v227, inf
    %233 = vmin.xlane.f32.xlu0 %v232
    %v234 = vpop.xlane.xlu0 %233
    %v235 = vcvt.f32.s32 %v234
    %v236 = vcvt.f32.s32 %v230
    %v237 = vshll.u32 %v236, 16
    %v238 = vadd.s32 %v237, %v235
    %vm239 = vcmp.eq.s32.totalorder %v196, %v238
    %v240 = vadd.f32 %v199, 0.0
    %v241 = vadd.f32 %v240, %v221
    %v242 = vadd.f32 %v241, 1e-06
    %v243 = vrcp.pop %v242
    %v244 = vmul.f32 %v199, %v243
    %v245 = vsel %vm217, %v244, 0.0
    %v246 = vsel %vm217, 1, 0
    %v247 = vcvt.s32.f32 %v246
    %v248 = vadd.f32 %v247, 0.0
    %v249 = vmul.f32 %v221, %v243
    %v250 = vsel %vm239, %v249, %v245
    %v251 = vsel %vm239, 1, 0
    %v252 = vcvt.s32.f32 %v251
    %v253 = vadd.f32 %v248, %v252
    %v254 = vsel %vm183, %v250, 0.0
    %v255 = vrot.slane %v254, 4
    %v256 = vadd.f32 %v254, %v255
    %v257 = vrot.slane %v256, 2
    %v258 = vadd.f32 %v256, %v257
    %v259 = vrot.slane %v258, 1
    %v260 = vadd.f32 %v258, %v259
    %vm261 = vcmask 24576
    %262 = vst.msk [vmem:[%s7] sm:$0x1] %vm261, %v260
    %v263 = vsel %vm183, %v253, 0.0
    %v264 = vrot.slane %v263, 4
    %v265 = vadd.f32 %v263, %v264
    %v266 = vrot.slane %v265, 2
    %v267 = vadd.f32 %v265, %v266
    %v268 = vrot.slane %v267, 1
    %v269 = vadd.f32 %v267, %v268
    %270 = vst.msk [vmem:[%s8] sm:$0x1] %vm261, %v269
    %v271 = vsel %vm30, %v27, 0.0
    %272 = vadd.xlane.f32.xlu0 %v271
    %v273 = vpop.xlane.xlu0 %272
    %v274 = vrcp.pop 16.0
    %v275 = vmul.f32 %v273, %v274
    %v276 = vsub.f32 %v27, %v275
    %v277 = vmul.f32 %v276, %v276
    %v278 = vsel %vm30, %v277, 0.0
    %279 = vadd.xlane.f32.xlu0 %v278
    %v280 = vpop.xlane.xlu0 %279
    %v281 = vmul.f32 %v280, %v274
    %v282 = vadd.f32 %v281, 1e-05
    %v283 = vrsqrt.pop %v282
    %v284 = vmul.f32 %v276, %v283
    %v285 = vld [vmem:[%s4] sm:$0xff]
    %287 = vset.pattern.permute.xlu0 0
    %288 = vperm.xlu0 %287, %v285
    %v289 = vpop.permute.xlu0 %288
    %v291 = vmul.f32 %v284, %v289
    %v292 = vld [vmem:[%s5] sm:$0xff]
    %294 = vset.pattern.permute.xlu0 0
    %295 = vperm.xlu0 %294, %v292
    %v296 = vpop.permute.xlu0 %295
    %v298 = vadd.f32 %v291, %v296
    %v299 = vld [vmem:[%s3] sm:$0xff]
    %v300 = vld [vmem:[%s3 + $0x8] sm:$0xff]
    %v302 = vsel %vm30, %v298, 0
    %304 = vmatprep.subr.mxu0 0.0
    %305 = vmatpush1.msra.mxu0 0.0
    %306 = vmatprep.subr.mxu0 0.0
    %307 = vmatpush1.msra.mxu0 0.0
    %308 = vmatprep.subr.mxu0 0.0
    %309 = vmatpush1.msra.mxu0 0.0
    %310 = vmatprep.subr.mxu0 0.0
    %311 = vmatpush1.msra.mxu0 0.0
    %312 = vmatprep.subr.mxu0 0.0
    %313 = vmatpush1.msra.mxu0 0.0
    %314 = vmatprep.subr.mxu0 0.0
    %315 = vmatpush1.msra.mxu0 0.0
    %316 = vmatprep.subr.mxu0 0.0
    %317 = vmatpush1.msra.mxu0 0.0
    %318 = vmatprep.subr.mxu0 0.0
    %319 = vmatpush1.msra.mxu0 0.0
    %320 = vmatprep.subr.mxu0 0.0
    %321 = vmatpush1.msra.mxu0 0.0
    %322 = vmatprep.subr.mxu0 0.0
    %323 = vmatpush1.msra.mxu0 0.0
    %324 = vmatprep.subr.mxu0 0.0
    %325 = vmatpush1.msra.mxu0 0.0
    %326 = vmatprep.subr.mxu0 0.0
    %327 = vmatpush1.msra.mxu0 0.0
    %328 = vmatprep.subr.mxu0 0.0
    %329 = vmatpush1.msra.mxu0 0.0
    %330 = vmatprep.subr.mxu0 0.0
    %331 = vmatpush1.msra.mxu0 0.0
    %332 = vmatprep.subr.mxu0 0.0
    %333 = vmatpush1.msra.mxu0 %v300
    %334 = vmatprep.subr.mxu0 0.0
    %335 = vmatpush1.msra.mxu0 %v299
    %336 = vmatprep.subr.mxu0 0.0
    %337 = vmatpush2.msra.mxu0 0.0
    %338 = vmatprep.subr.mxu0 0.0
    %339 = vmatpush2.msra.mxu0 0.0
    %340 = vmatprep.subr.mxu0 0.0
    %341 = vmatpush2.msra.mxu0 0.0
    %342 = vmatprep.subr.mxu0 0.0
    %343 = vmatpush2.msra.mxu0 0.0
    %344 = vmatprep.subr.mxu0 0.0
    %345 = vmatpush2.msra.mxu0 0.0
    %346 = vmatprep.subr.mxu0 0.0
    %347 = vmatpush2.msra.mxu0 0.0
    %348 = vmatprep.subr.mxu0 0.0
    %349 = vmatpush2.msra.mxu0 0.0
    %350 = vmatprep.subr.mxu0 0.0
    %351 = vmatpush2.msra.mxu0 0.0
    %352 = vmatprep.subr.mxu0 0.0
    %353 = vmatpush2.msra.mxu0 0.0
    %354 = vmatprep.subr.mxu0 0.0
    %355 = vmatpush2.msra.mxu0 0.0
    %356 = vmatprep.subr.mxu0 0.0
    %357 = vmatpush2.msra.mxu0 0.0
    %358 = vmatprep.subr.mxu0 0.0
    %359 = vmatpush2.msra.mxu0 0.0
    %360 = vmatprep.subr.mxu0 0.0
    %361 = vmatpush2.msra.mxu0 0.0
    %362 = vmatprep.subr.mxu0 0.0
    %363 = vmatpush2.msra.mxu0 0.0
    %364 = vmatprep.subr.mxu0 0.0
    %365 = vmatpush2.msra.mxu0 0.0
    %366 = vmatprep.subr.mxu0 0.0
    %367 = vmatpush2.msra.mxu0 0.0
    %368 = vmatprep.mubr.f32.mxu0 0.0
    %369 = vmatmul.mubr.f32.gmra.mxu0 %v302
    %v370 = vpop.f32.mrf.mxu0
    %v371 = vadd.f32 0.0, %v370
    %v372 = vpop.f32.mrf.mxu0
    %373 = vdwg.mxu0
    %375 = vset.pattern.permute.xlu0 0
    %376 = vperm.xlu0 %375, %v250
    %v377 = vpop.permute.xlu0 %376
    %v379 = vmul.f32 %v377, %v371
    %v380 = vadd.f32 %v379, 0.0
    %381 = vset.pattern.permute.xlu0 1
    %382 = vperm.xlu0 %381, %v250
    %v383 = vpop.permute.xlu0 %382
    %v385 = vmul.f32 %v383, %v371
    %387 = vrot.lane.b32.xlu0 %v385, 120
    %v388 = vpop.permute.xlu0 %387
    %v390 = vadd.f32 %v380, %v388
    %391 = vset.pattern.permute.xlu0 2
    %392 = vperm.xlu0 %391, %v250
    %v393 = vpop.permute.xlu0 %392
    %v395 = vmul.f32 %v393, %v371
    %397 = vrot.lane.b32.xlu0 %v395, 112
    %v398 = vpop.permute.xlu0 %397
    %v400 = vadd.f32 %v390, %v398
    %401 = vset.pattern.permute.xlu0 3
    %402 = vperm.xlu0 %401, %v250
    %v403 = vpop.permute.xlu0 %402
    %v405 = vmul.f32 %v403, %v371
    %407 = vrot.lane.b32.xlu0 %v405, 104
    %v408 = vpop.permute.xlu0 %407
    %v410 = vadd.f32 %v400, %v408
    %vm411 = vcmask 64512
    %412 = vst.msk [vmem:[#allocation2] sm:$0xff] %vm411, %v410
    // Predicated region
    $region26: #{mixture_of_experts_forward.1} parent=1 // pred_check
      _
    $region27: #{mixture_of_experts_forward.1} parent=1 // pred_check_branch
      %414 = sbr.rel (0) target = $region29
    $region28: #{mixture_of_experts_forward.1} parent=1 // pred_region
      %s416 = ssub.s32 128, 128
      %417 = vsyncadd [#allocation3], %s416
      %s419 = sshll.u32 [#allocation2], 4
      %s420 = int_to_ptr.vmem [resolvable:$true] %s419
      %422 = dma.vmem_to_hbm [thread:$0]  %s420, 128, %s6, [#allocation3]
    $region29: #{mixture_of_experts_forward.1} parent=1 // pred_fallthru
      _
    // Predicated region
    $region30: #{mixture_of_experts_forward.1} parent=1 // pred_check
      _
    $region31: #{mixture_of_experts_forward.1} parent=1 // pred_check_branch
      %424 = sbr.rel (0) target = $region33
    $region32: #{mixture_of_experts_forward.1} parent=1 // pred_region
      _
    $region33: #{mixture_of_experts_forward.1} parent=1 // pred_fallthru
      _
    // Predicated region
    $region34: #{mixture_of_experts_forward.1} parent=1 // pred_check
      _
    $region35: #{mixture_of_experts_forward.1} parent=1 // pred_check_branch
      %426 = sbr.rel (0) target = $region37
    $region36: #{mixture_of_experts_forward.1} parent=1 // pred_region
      _
    $region37: #{mixture_of_experts_forward.1} parent=1 // pred_fallthru
      _
    // Predicated region
    $region38: #{mixture_of_experts_forward.1} parent=1 // pred_check
      _
    $region39: #{mixture_of_experts_forward.1} parent=1 // pred_check_branch
      %428 = sbr.rel (0) target = $region41
    $region40: #{mixture_of_experts_forward.1} parent=1 // pred_region
      %429 = dma.done [#allocation3], 128
    $region41: #{mixture_of_experts_forward.1} parent=1 // pred_fallthru
      _
    // Predicated region
    $region42: #{mixture_of_experts_forward.1} parent=1 // pred_check
      _
    $region43: #{mixture_of_experts_forward.1} parent=1 // pred_check_branch
      %431 = sbr.rel (0) target = $region45
    $region44: #{mixture_of_experts_forward.1} parent=1 // pred_region
      _
    $region45: #{mixture_of_experts_forward.1} parent=1 // pred_fallthru
      _
    // Predicated region
    $region46: #{mixture_of_experts_forward.1} parent=1 // pred_check
      _
    $region47: #{mixture_of_experts_forward.1} parent=1 // pred_check_branch
      %433 = sbr.rel (0) target = $region49
    $region48: #{mixture_of_experts_forward.1} parent=1 // pred_region
      _
    $region49: #{mixture_of_experts_forward.1} parent=1 // pred_fallthru
      _
    %434 = vsyncpa [#allocation3], 1

</llo_original>
